<compile_context>
chip_gen: v5e
topology: v5e:2x2
jax: 0.10.0
libtpu: 0.0.40
codegen_flags: <defaults>
</compile_context>

<pallas_src>
import jax
import jax.numpy as jnp
from jax.experimental import pallas as pl
from jax.experimental.pallas import tpu as pltpu

IN_FEATURES = 3
OUT_FEATURES = 5
_TM_MAX = 32768           # lane-axis tile (rows of x); multiple of 128
_PALLAS_MIN_ROWS = 32768  # below this, plain XLA is strictly faster


def _round_up(n, m):
    return (n + m - 1) // m * m


def _linear_kernel(x_ref, w_ref, b_ref, o_ref):
    """Feature-major, fully vectorized 3->5 linear on the VPU.

    x_ref: [3, TM]  f32 VMEM (rows of x on the lane axis -> full-lane loads)
    w_ref: [5, 3]   f32 VMEM (constant block, torch Linear weight layout)
    b_ref: [5, 1]   f32 VMEM (constant block)
    o_ref: [5, TM]  f32 VMEM (single full-block, unmasked store)
    """
    acc = w_ref[:, 0:1] * x_ref[0:1, :]             # (5,1)*(1,TM) -> (5,TM)
    acc = acc + w_ref[:, 1:2] * x_ref[1:2, :]
    acc = acc + w_ref[:, 2:3] * x_ref[2:3, :]
    o_ref[...] = acc + b_ref[...]                   # one full (5,TM) store


def pallas_linear(x_flat, weight, bias):
    """x_flat: [M, 3] f32, weight: [5, 3] f32, bias: [5] f32 -> [M, 5] f32."""
    M = x_flat.shape[0]
    Mp128 = _round_up(max(M, 1), 128)

    # Block count: keep each tile <= _TM_MAX, and use >= 2 blocks once there
    # is real work so the "parallel" axis shards across v7x's two TensorCores.
    n_blocks = -(-Mp128 // _TM_MAX)
    if Mp128 >= 256:
        n_blocks = max(n_blocks, 2)
    tm = _round_up(-(-Mp128 // n_blocks), 128)
    Mp = tm * n_blocks  # padding waste bounded by < 128 rows per block

    # Wrapper-side layout plumbing: feature-major with M on the lane axis.
    # TODO(synk): the transpose+pad here and the final .T add ~2x extra HBM
    # traffic on top of the kernel's 32 B/row; this path is only taken for
    # large M (small/medium M goes through the fused XLA fallback).
    x_t = jnp.pad(x_flat.T, ((0, 0), (0, Mp - M)))  # [3, Mp]
    b2d = bias.reshape(OUT_FEATURES, 1)

    y_t = pl.pallas_call(
        _linear_kernel,
        out_shape=jax.ShapeDtypeStruct((OUT_FEATURES, Mp), x_flat.dtype),
        grid_spec=pltpu.PrefetchScalarGridSpec(
            num_scalar_prefetch=0,
            grid=(n_blocks,),
            in_specs=[
                # x block: full feature dim (3 == array dim), lane-dense tile.
                pl.BlockSpec((IN_FEATURES, tm), lambda i: (0, i)),
                # weight / bias: whole tiny arrays, constant index map.
                pl.BlockSpec((OUT_FEATURES, IN_FEATURES), lambda i: (0, 0)),
                pl.BlockSpec((OUT_FEATURES, 1), lambda i: (0, 0)),
            ],
            out_specs=pl.BlockSpec((OUT_FEATURES, tm), lambda i: (0, i)),
        ),
        compiler_params=pltpu.CompilerParams(
            dimension_semantics=("parallel",),
        ),
        cost_estimate=pl.CostEstimate(
            flops=2 * Mp * IN_FEATURES * OUT_FEATURES,
            bytes_accessed=Mp * (IN_FEATURES + OUT_FEATURES) * 4,
            transcendentals=0,
        ),
    )(x_t, weight, b2d)

    # Drop lane padding, back to row-major [M, 5].
    return y_t[:, :M].T


def _xla_linear(x_flat, weight, bias):
    return x_flat @ weight.T + bias


class TupleReturnModule2:
    """JAX/Pallas port of the PyTorch TupleReturnModule2 (Linear(3, 5))."""

    def __init__(self, return_type=0, key=None):
        self.return_type = return_type
        if key is None:
            key = jax.random.PRNGKey(42)
        kw, kb = jax.random.split(key)
        # Deterministic init mimicking torch.nn.Linear's U(-1/sqrt(in), 1/sqrt(in))
        bound = 1.0 / (IN_FEATURES ** 0.5)
        self.weight = jax.random.uniform(
            kw, (OUT_FEATURES, IN_FEATURES), jnp.float32, -bound, bound)
        self.bias = jax.random.uniform(
            kb, (OUT_FEATURES,), jnp.float32, -bound, bound)

    def __call__(self, x, force_pallas=False):
        lead = x.shape[:-1]
        x_flat = x.reshape(-1, IN_FEATURES)
        M = x_flat.shape[0]
        if force_pallas or M >= _PALLAS_MIN_ROWS:
            y_flat = pallas_linear(x_flat, self.weight, self.bias)
        else:
            # Small/medium M: fused XLA op beats pallas_call launch + layout
            # plumbing by a wide margin for this HBM-bound 3->5 linear.
            y_flat = _xla_linear(x_flat, self.weight, self.bias)
        y = y_flat.reshape(*lead, OUT_FEATURES)
        if self.return_type == 0:
            return (y,)
        else:
            return [[y]]


if __name__ == "__main__":
    key = jax.random.PRNGKey(0)
    x = jax.random.normal(key, (2, 8, IN_FEATURES), dtype=jnp.float32)

    mod = TupleReturnModule2(return_type=0)
    y_ref = x @ mod.weight.T + mod.bias

    # 1) Module forward at the small test shape (fast XLA dispatch path).
    out = mod(x)
    assert isinstance(out, tuple) and len(out) == 1
    y = jax.block_until_ready(out[0])
    assert y.shape == (2, 8, OUT_FEATURES)
    assert jnp.allclose(y, y_ref, atol=1e-5, rtol=1e-5)

    # 2) Pallas kernel itself at the same small shape (single 128-wide block).
    out_p = mod(x, force_pallas=True)
    y_p = jax.block_until_ready(out_p[0])
    assert jnp.allclose(y_p, y_ref, atol=1e-5, rtol=1e-5)

    # 3) Pallas path above the dispatch threshold (multi-block "parallel"
    #    grid, awkward M to exercise the bounded-padding tiling).
    M_big = 70001
    xb = jax.random.normal(jax.random.PRNGKey(1), (M_big, IN_FEATURES), jnp.float32)
    yb = jax.block_until_ready(pallas_linear(xb, mod.weight, mod.bias))
    yb_ref = xb @ mod.weight.T + mod.bias
    assert jnp.allclose(yb, yb_ref, atol=1e-4, rtol=1e-4)

    # 4) Exercise the other return-type path (same compute underneath).
    out2 = TupleReturnModule2(return_type=1)(x)
    assert isinstance(out2, list) and isinstance(out2[0], list)
    jax.block_until_ready(out2[0][0])

    print("KERNEL_OK")
</pallas_src>

<mosaic_0001>
module attributes {stable_mosaic.version = 11 : i64} {
  func.func @_linear_kernel(%arg0: i32, %arg1: memref<3x128xf32, #tpu.memory_space<vmem>>, %arg2: memref<5x3xf32, #tpu.memory_space<vmem>>, %arg3: memref<5x1xf32, #tpu.memory_space<vmem>>, %arg4: memref<5x128xf32, #tpu.memory_space<vmem>>) attributes {dimension_semantics = [#tpu.dimension_semantics<parallel>], iteration_bounds = array<i64: 1>, scalar_prefetch = 0 : i64, scratch_operands = 0 : i64, tpu.core_type = #tpu.core_type<tc>, window_params = [{transform_indices = @transform_0, window_bounds = array<i64: 3, 128>}, {pipeline_mode = #tpu.pipeline_mode<synchronous>, transform_indices = @transform_1, window_bounds = array<i64: 5, 3>}, {pipeline_mode = #tpu.pipeline_mode<synchronous>, transform_indices = @transform_2, window_bounds = array<i64: 5, 1>}, {transform_indices = @transform_3, window_bounds = array<i64: 5, 128>}]} {
    %c0 = arith.constant 0 : index
    %c0_0 = arith.constant 0 : index
    %0 = vector.load %arg2[%c0, %c0_0] : memref<5x3xf32, #tpu.memory_space<vmem>>, vector<5x1xf32>
    %c0_1 = arith.constant 0 : index
    %c0_2 = arith.constant 0 : index
    %1 = vector.load %arg1[%c0_1, %c0_2] : memref<3x128xf32, #tpu.memory_space<vmem>>, vector<1x128xf32>
    %2 = vector.broadcast %0 : vector<5x1xf32> to vector<5x128xf32>
    %3 = vector.broadcast %1 : vector<1x128xf32> to vector<5x128xf32>
    %4 = arith.mulf %2, %3 : vector<5x128xf32>
    %c0_3 = arith.constant 0 : index
    %c1 = arith.constant 1 : index
    %5 = vector.load %arg2[%c0_3, %c1] : memref<5x3xf32, #tpu.memory_space<vmem>>, vector<5x1xf32>
    %c1_4 = arith.constant 1 : index
    %c0_5 = arith.constant 0 : index
    %6 = vector.load %arg1[%c1_4, %c0_5] : memref<3x128xf32, #tpu.memory_space<vmem>>, vector<1x128xf32>
    %7 = vector.broadcast %5 : vector<5x1xf32> to vector<5x128xf32>
    %8 = vector.broadcast %6 : vector<1x128xf32> to vector<5x128xf32>
    %9 = arith.mulf %7, %8 : vector<5x128xf32>
    %10 = arith.addf %4, %9 : vector<5x128xf32>
    %c0_6 = arith.constant 0 : index
    %c2 = arith.constant 2 : index
    %11 = vector.load %arg2[%c0_6, %c2] : memref<5x3xf32, #tpu.memory_space<vmem>>, vector<5x1xf32>
    %c2_7 = arith.constant 2 : index
    %c0_8 = arith.constant 0 : index
    %12 = vector.load %arg1[%c2_7, %c0_8] : memref<3x128xf32, #tpu.memory_space<vmem>>, vector<1x128xf32>
    %13 = vector.broadcast %11 : vector<5x1xf32> to vector<5x128xf32>
    %14 = vector.broadcast %12 : vector<1x128xf32> to vector<5x128xf32>
    %15 = arith.mulf %13, %14 : vector<5x128xf32>
    %16 = arith.addf %10, %15 : vector<5x128xf32>
    %c0_9 = arith.constant 0 : index
    %c0_10 = arith.constant 0 : index
    %17 = vector.load %arg3[%c0_9, %c0_10] : memref<5x1xf32, #tpu.memory_space<vmem>>, vector<5x1xf32>
    %18 = vector.broadcast %17 : vector<5x1xf32> to vector<5x128xf32>
    %19 = arith.addf %16, %18 : vector<5x128xf32>
    %c0_11 = arith.constant 0 : index
    %c0_12 = arith.constant 0 : index
    %20 = vector.load %arg4[%c0_11, %c0_12] : memref<5x128xf32, #tpu.memory_space<vmem>>, vector<5x128xf32>
    tpu.vector_store %arg4[%c0_11, %c0_12], %19 {strides = array<i32>} : memref<5x128xf32, #tpu.memory_space<vmem>>, vector<5x128xf32>,
    return
  }
  func.func @transform_0(%arg0: i32) -> (i32, i32) {
    %c0_i32 = arith.constant 0 : i32
    %c0_i32_0 = arith.constant 0 : i32
    return %c0_i32, %arg0 : i32, i32
  }
  func.func @transform_1(%arg0: i32) -> (i32, i32) {
    %c0_i32 = arith.constant 0 : i32
    %c0_i32_0 = arith.constant 0 : i32
    %c0_i32_1 = arith.constant 0 : i32
    return %c0_i32, %c0_i32_0 : i32, i32
  }
  func.func @transform_2(%arg0: i32) -> (i32, i32) {
    %c0_i32 = arith.constant 0 : i32
    %c0_i32_0 = arith.constant 0 : i32
    %c0_i32_1 = arith.constant 0 : i32
    return %c0_i32, %c0_i32_0 : i32, i32
  }
  func.func @transform_3(%arg0: i32) -> (i32, i32) {
    %c0_i32 = arith.constant 0 : i32
    %c0_i32_0 = arith.constant 0 : i32
    return %c0_i32, %arg0 : i32, i32
  }
}

</mosaic_0001>

<llo_original>
// kernel: tpu_custom_call.1
$region0: #{tpu_custom_call.1}
  #allocation0 [shape = 'u32[]', space=smem, size = 0x4, offset = 0x4, fixed_abs, tag = 'smem constant byte address 0x4 - core index']
  #allocation1 [shape = 'u32[72,128]{1,0:T(1,128)}', space=vmem, size = 0x9000, scoped, tag = 'internal scratch']
  %s0 = inlined_call_operand.vmem [shape: f32[3,128], index: 0, kind: input, shape index: {}]
  %s1 = inlined_call_operand.vmem [shape: f32[5,3], index: 1, kind: input, shape index: {}]
  %s2 = inlined_call_operand.vmem [shape: f32[5,1], index: 2, kind: input, shape index: {}]
  %s3 = inlined_call_operand.hbm [shape: f32[5,128], index: 3, kind: output, shape index: {}]
  %s4 = sld [smem:[#allocation0]]
  $region22: #{tpu_custom_call.1} parent=0
    _
  %s6 = ssub.s32 1, %s4
  %s7 = scalar_select 0, %s6, %s4
  $region1: #{tpu_custom_call.1} parent=0
    #allocation2 [shape = 'u8[4096]{0}', space=vmem, size = 0x1000, scoped, tag = 'output window, operand 0, single buffered']
    #allocation3 [shape = 's32[1]{0}', space=sflag, size = 0x4, scoped, tag = 'scoped memory for tpu_custom_call.1']
    %8 = vsyncpa [#allocation3], 0
    // Predicated region
    $region2: #{tpu_custom_call.1} parent=1 // pred_check
      _
    $region3: #{tpu_custom_call.1} parent=1 // pred_check_branch
      %10 = sbr.rel (0) target = $region5
    $region4: #{tpu_custom_call.1} parent=1 // pred_region
      _
    $region5: #{tpu_custom_call.1} parent=1 // pred_fallthru
      _
    // Predicated region
    $region6: #{tpu_custom_call.1} parent=1 // pred_check
      _
    $region7: #{tpu_custom_call.1} parent=1 // pred_check_branch
      %12 = sbr.rel (0) target = $region9
    $region8: #{tpu_custom_call.1} parent=1 // pred_region
      _
    $region9: #{tpu_custom_call.1} parent=1 // pred_fallthru
      _
    // Predicated region
    $region10: #{tpu_custom_call.1} parent=1 // pred_check
      _
    $region11: #{tpu_custom_call.1} parent=1 // pred_check_branch
      %14 = sbr.rel (0) target = $region13
    $region12: #{tpu_custom_call.1} parent=1 // pred_region
      _
    $region13: #{tpu_custom_call.1} parent=1 // pred_fallthru
      _
    %v15 = vld [vmem:[%s1] sm:$0x1f]
    %v16 = vld [vmem:[%s0] sm:$0x1]
    %18 = vset.pattern.permute.xlu0 0
    %19 = vperm.xlu0 %18, %v15
    %v20 = vpop.permute.xlu0 %19
    %v22 = vperm.slane %v16, 0
    %v23 = vmul.f32 %v20, %v22
    %v24 = vld [vmem:[%s0 + $0x1] sm:$0x1]
    %25 = vset.pattern.permute.xlu0 1
    %26 = vperm.xlu0 %25, %v15
    %v27 = vpop.permute.xlu0 %26
    %v29 = vperm.slane %v24, 0
    %v30 = vmul.f32 %v27, %v29
    %v31 = vadd.f32 %v23, %v30
    %v32 = vld [vmem:[%s0 + $0x2] sm:$0x1]
    %33 = vset.pattern.permute.xlu0 2
    %34 = vperm.xlu0 %33, %v15
    %v35 = vpop.permute.xlu0 %34
    %v37 = vperm.slane %v32, 0
    %v38 = vmul.f32 %v35, %v37
    %v39 = vadd.f32 %v31, %v38
    %v40 = vld [vmem:[%s2] sm:$0x1f]
    %42 = vset.pattern.permute.xlu0 0
    %43 = vperm.xlu0 %42, %v40
    %v44 = vpop.permute.xlu0 %43
    %v46 = vadd.f32 %v39, %v44
    %47 = vst [vmem:[#allocation2] sm:$0x1f] %v46
    // Predicated region
    $region14: #{tpu_custom_call.1} parent=1 // pred_check
      _
    $region15: #{tpu_custom_call.1} parent=1 // pred_check_branch
      %49 = sbr.rel (0) target = $region17
    $region16: #{tpu_custom_call.1} parent=1 // pred_region
      %51 = vsyncadd [#allocation3], 0
      %s53 = sshll.u32 [#allocation2], 4
      %s54 = int_to_ptr.vmem [resolvable:$true] %s53
      %s55 = sshll.u32 %s3, 4
      %s56 = int_to_ptr.hbm [resolvable:$true] %s55
      %58 = dma.vmem_to_hbm [thread:$0]  %s54, 128, %s56, [#allocation3]
    $region17: #{tpu_custom_call.1} parent=1 // pred_fallthru
      _
    // Predicated region
    $region18: #{tpu_custom_call.1} parent=1 // pred_check
      _
    $region19: #{tpu_custom_call.1} parent=1 // pred_check_branch
      %60 = sbr.rel (0) target = $region21
    $region20: #{tpu_custom_call.1} parent=1 // pred_region
      %62 = dma.done [#allocation3], 128
    $region21: #{tpu_custom_call.1} parent=1 // pred_fallthru
      _
    %63 = vsyncpa [#allocation3], 1

</llo_original>
